<compile_context>
chip_gen: v5e
topology: v5e:2x2
jax: 0.10.0
libtpu: 0.0.40
codegen_flags: <defaults>
</compile_context>

<pallas_src>
import functools

import jax
import jax.numpy as jnp
from jax.experimental import pallas as pl
from jax.experimental.pallas import tpu as pltpu


def _round_up(n, m):
    return ((n + m - 1) // m) * m


# -----------------------------------------------------------------------------
# Fused whole-MLP kernel (single pallas_call, everything resident in VMEM).
# -----------------------------------------------------------------------------
def _fused_mlp_kernel(*refs, n_layers, relu_last):
    # refs = (x, w0, b0, w1, b1, ..., w_{L-1}, b_{L-1}, out)
    x_ref = refs[0]
    o_ref = refs[-1]
    h = x_ref[...]
    for i in range(n_layers):
        w = refs[1 + 2 * i][...]
        b = refs[2 + 2 * i][...]
        h = jnp.dot(h, w, preferred_element_type=jnp.float32) + b
        if i < n_layers - 1 or relu_last:
            h = jnp.maximum(h, 0.0)
    o_ref[...] = h.astype(o_ref.dtype)


def fused_mlp_pallas(x, layers, *, relu_last):
    """Run the whole MLP in one kernel. x:(B,K0); layers: [(w,b), ...]."""
    B, _ = x.shape
    Bp = _round_up(max(B, 8), 8)  # at least one sublane tile of rows
    if Bp != B:
        x = jnp.pad(x, ((0, Bp - B), (0, 0)))

    n = len(layers)
    last_n = layers[-1][0].shape[1]
    flat = [x]
    for i, (w, b) in enumerate(layers):
        b = b.reshape(1, -1)
        if i == n - 1:
            # lane-dense output: pad the final projection to a multiple of 128
            np_cols = _round_up(w.shape[1], 128)
            if np_cols != w.shape[1]:
                w = jnp.pad(w, ((0, 0), (0, np_cols - w.shape[1])))
                b = jnp.pad(b, ((0, 0), (0, np_cols - b.shape[1])))
        flat += [w, b]
    out_cols = flat[-2].shape[1]

    kernel = functools.partial(_fused_mlp_kernel, n_layers=n, relu_last=relu_last)
    out = pl.pallas_call(
        kernel,
        out_shape=jax.ShapeDtypeStruct((Bp, out_cols), jnp.float32),
        compiler_params=pltpu.CompilerParams(
            vmem_limit_bytes=32 * 1024 * 1024,
        ),
    )(*flat)
    return out[:B, :last_n]


def _fused_fits(x, layers, budget_bytes=20 * 1024 * 1024):
    """Conservative single-buffer VMEM estimate for the fused kernel."""
    total = _round_up(max(x.shape[0], 8), 8) * x.shape[1] * 4
    for w, b in layers:
        total += w.size * 4 + _round_up(b.size, 128) * 4
        total += _round_up(max(x.shape[0], 8), 8) * _round_up(w.shape[1], 128) * 4
    return total <= budget_bytes


# -----------------------------------------------------------------------------
# Tiled single-layer fallback for layers too large for full-VMEM fusion.
# Accumulates directly into the VMEM-resident output block (no scratch).
# -----------------------------------------------------------------------------
def _linear_tiled_kernel(x_ref, w_ref, b_ref, o_ref, *, apply_relu):
    k = pl.program_id(2)

    @pl.when(k == 0)
    def _():
        o_ref[...] = jnp.zeros_like(o_ref)

    o_ref[...] += jnp.dot(
        x_ref[...], w_ref[...], preferred_element_type=jnp.float32
    )

    @pl.when(k == pl.num_programs(2) - 1)
    def _():
        out = o_ref[...] + b_ref[...]
        if apply_relu:
            out = jnp.maximum(out, 0.0)
        o_ref[...] = out


def linear_pallas(x, w, b, *, apply_relu, tm=None, tn=256, tk=512):
    """y = relu?(x @ w + b) with (M-parallel, N-parallel, K-arbitrary) tiling."""
    M, K = x.shape
    Kw, N = w.shape
    assert K == Kw
    b = b.reshape(1, -1)

    tm = tm or min(128, _round_up(max(M, 8), 8))
    tn = min(tn, _round_up(N, 128))
    tk = min(tk, _round_up(K, 128))
    Mp, Np, Kp = _round_up(M, tm), _round_up(N, tn), _round_up(K, tk)

    xp = jnp.pad(x, ((0, Mp - M), (0, Kp - K))) if (Mp, Kp) != (M, K) else x
    wp = jnp.pad(w, ((0, Kp - K), (0, Np - N))) if (Kp, Np) != (K, N) else w
    bp = jnp.pad(b, ((0, 0), (0, Np - N))) if Np != N else b

    grid = (Mp // tm, Np // tn, Kp // tk)
    out = pl.pallas_call(
        functools.partial(_linear_tiled_kernel, apply_relu=apply_relu),
        out_shape=jax.ShapeDtypeStruct((Mp, Np), jnp.float32),
        grid_spec=pltpu.PrefetchScalarGridSpec(
            num_scalar_prefetch=0,
            grid=grid,
            in_specs=[
                pl.BlockSpec((tm, tk), lambda i, j, k: (i, k)),
                pl.BlockSpec((tk, tn), lambda i, j, k: (k, j)),
                pl.BlockSpec((1, tn), lambda i, j, k: (0, j)),
            ],
            out_specs=pl.BlockSpec((tm, tn), lambda i, j, k: (i, j)),
        ),
        compiler_params=pltpu.CompilerParams(
            dimension_semantics=("parallel", "parallel", "arbitrary"),
            vmem_limit_bytes=32 * 1024 * 1024,
        ),
    )(xp, wp, bp)
    return out[:M, :N]


# -----------------------------------------------------------------------------
# Parameter init + forward matching LinearModel.forward
# -----------------------------------------------------------------------------
def init_linear_params(key, in_features, out_features):
    """Mimics torch.nn.Linear's uniform(-1/sqrt(in), 1/sqrt(in)) init."""
    kw, kb = jax.random.split(key)
    bound = 1.0 / jnp.sqrt(jnp.float32(in_features))
    w = jax.random.uniform(
        kw, (in_features, out_features), jnp.float32, minval=-bound, maxval=bound
    )
    b = jax.random.uniform(
        kb, (1, out_features), jnp.float32, minval=-bound, maxval=bound
    )
    return w, b


def init_linear_model(key, input_size, hidden_layers=1, hidden_size=256, output_size=1):
    params = []
    keys = jax.random.split(key, hidden_layers + 2)
    params.append(init_linear_params(keys[0], input_size, hidden_size))
    for i in range(hidden_layers):
        params.append(init_linear_params(keys[1 + i], hidden_size, hidden_size))
    params.append(init_linear_params(keys[-1], hidden_size, output_size))
    return params


def linear_model_forward(params, x, only_feats=False, force_tiled=False):
    """Matches LinearModel.forward: flatten if ndim>2, MLP with ReLU between layers.

    only_feats=True runs mlp[:-1] (drops the final Linear, keeps the last ReLU).
    """
    if x.ndim > 2:
        x = x.reshape(x.shape[0], -1)
    layers = params[:-1] if only_feats else params
    relu_last = only_feats  # mlp[:-1] ends with a ReLU

    if not force_tiled and _fused_fits(x, layers):
        return fused_mlp_pallas(x, layers, relu_last=relu_last)

    # Fallback: per-layer tiled kernels (large hidden sizes, e.g. 2560+).
    n = len(layers)
    for i, (w, b) in enumerate(layers):
        apply_relu = (i < n - 1) or relu_last
        x = linear_pallas(x, w, b, apply_relu=apply_relu)
    return x


if __name__ == "__main__":
    key = jax.random.PRNGKey(0)
    k_in, k_params = jax.random.split(key)

    # small shapes: batch=2, channels=4, spatial=16 -> input_size = 4*16*16 = 1024
    B, C, H, W = 2, 4, 16, 16
    input_size = C * H * W
    hidden_size = 256
    hidden_layers = 1
    output_size = 1

    x = jax.random.normal(k_in, (B, C, H, W), dtype=jnp.float32)
    params = init_linear_model(
        k_params, input_size, hidden_layers, hidden_size, output_size
    )

    # plain-JAX reference
    xf = x.reshape(B, -1)
    ref = xf
    for i, (w, b) in enumerate(params):
        ref = ref @ w + b
        if i < len(params) - 1:
            ref = jnp.maximum(ref, 0.0)
    ref_feats = xf
    for w, b in params[:-1]:
        ref_feats = jnp.maximum(ref_feats @ w + b, 0.0)

    # fused path (the one that matters for these shapes)
    out = jax.block_until_ready(linear_model_forward(params, x))
    assert out.shape == (B, output_size), out.shape
    assert jnp.allclose(out, ref, atol=1e-4, rtol=1e-4)

    # only_feats path (features before the final projection, includes last ReLU)
    feats = jax.block_until_ready(linear_model_forward(params, x, only_feats=True))
    assert feats.shape == (B, hidden_size), feats.shape
    assert jnp.allclose(feats, ref_feats, atol=1e-4, rtol=1e-4)

    # exercise the tiled fallback path too (used for large hidden sizes)
    out_tiled = jax.block_until_ready(
        linear_model_forward(params, x, force_tiled=True)
    )
    assert jnp.allclose(out_tiled, ref, atol=1e-4, rtol=1e-4)

    print("KERNEL_OK")
</pallas_src>

<mosaic_0001>
module attributes {stable_mosaic.version = 11 : i64} {
  func.func @_fused_mlp_kernel(%arg0: memref<8x1024xf32, #tpu.memory_space<vmem>>, %arg1: memref<1024x256xf32, #tpu.memory_space<vmem>>, %arg2: memref<1x256xf32, #tpu.memory_space<vmem>>, %arg3: memref<256x256xf32, #tpu.memory_space<vmem>>, %arg4: memref<1x256xf32, #tpu.memory_space<vmem>>, %arg5: memref<256x128xf32, #tpu.memory_space<vmem>>, %arg6: memref<1x128xf32, #tpu.memory_space<vmem>>, %arg7: memref<8x128xf32, #tpu.memory_space<vmem>>) attributes {dimension_semantics = [], scalar_prefetch = 0 : i64, scratch_operands = 0 : i64, tpu.core_type = #tpu.core_type<tc>} {
    %c0 = arith.constant 0 : index
    %c0_0 = arith.constant 0 : index
    %0 = vector.load %arg0[%c0, %c0_0] : memref<8x1024xf32, #tpu.memory_space<vmem>>, vector<8x1024xf32>
    %c0_1 = arith.constant 0 : index
    %c0_2 = arith.constant 0 : index
    %1 = vector.load %arg1[%c0_1, %c0_2] : memref<1024x256xf32, #tpu.memory_space<vmem>>, vector<1024x256xf32>
    %c0_3 = arith.constant 0 : index
    %c0_4 = arith.constant 0 : index
    %2 = vector.load %arg2[%c0_3, %c0_4] : memref<1x256xf32, #tpu.memory_space<vmem>>, vector<1x256xf32>
    %cst = arith.constant dense<0.000000e+00> : vector<8x256xf32>
    %3 = tpu.matmul %0, %1, %cst {dimension_numbers = #tpu.dot_dimension_numbers<[1], [0], [0], [1], [0, 0, 1, 1], [], []>} : vector<8x1024xf32>, vector<1024x256xf32>, vector<8x256xf32> -> vector<8x256xf32>
    %4 = vector.broadcast %2 : vector<1x256xf32> to vector<8x256xf32>
    %5 = arith.addf %3, %4 : vector<8x256xf32>
    %cst_5 = arith.constant 0.000000e+00 : f32
    %6 = vector.broadcast %cst_5 : f32 to vector<8x256xf32>
    %7 = arith.maximumf %5, %6 : vector<8x256xf32>
    %c0_6 = arith.constant 0 : index
    %c0_7 = arith.constant 0 : index
    %8 = vector.load %arg3[%c0_6, %c0_7] : memref<256x256xf32, #tpu.memory_space<vmem>>, vector<256x256xf32>
    %c0_8 = arith.constant 0 : index
    %c0_9 = arith.constant 0 : index
    %9 = vector.load %arg4[%c0_8, %c0_9] : memref<1x256xf32, #tpu.memory_space<vmem>>, vector<1x256xf32>
    %cst_10 = arith.constant dense<0.000000e+00> : vector<8x256xf32>
    %10 = tpu.matmul %7, %8, %cst_10 {dimension_numbers = #tpu.dot_dimension_numbers<[1], [0], [0], [1], [0, 0, 1, 1], [], []>} : vector<8x256xf32>, vector<256x256xf32>, vector<8x256xf32> -> vector<8x256xf32>
    %11 = vector.broadcast %9 : vector<1x256xf32> to vector<8x256xf32>
    %12 = arith.addf %10, %11 : vector<8x256xf32>
    %cst_11 = arith.constant 0.000000e+00 : f32
    %13 = vector.broadcast %cst_11 : f32 to vector<8x256xf32>
    %14 = arith.maximumf %12, %13 : vector<8x256xf32>
    %c0_12 = arith.constant 0 : index
    %c0_13 = arith.constant 0 : index
    %15 = vector.load %arg5[%c0_12, %c0_13] : memref<256x128xf32, #tpu.memory_space<vmem>>, vector<256x128xf32>
    %c0_14 = arith.constant 0 : index
    %c0_15 = arith.constant 0 : index
    %16 = vector.load %arg6[%c0_14, %c0_15] : memref<1x128xf32, #tpu.memory_space<vmem>>, vector<1x128xf32>
    %cst_16 = arith.constant dense<0.000000e+00> : vector<8x128xf32>
    %17 = tpu.matmul %14, %15, %cst_16 {dimension_numbers = #tpu.dot_dimension_numbers<[1], [0], [0], [1], [0, 0, 1, 1], [], []>} : vector<8x256xf32>, vector<256x128xf32>, vector<8x128xf32> -> vector<8x128xf32>
    %18 = vector.broadcast %16 : vector<1x128xf32> to vector<8x128xf32>
    %19 = arith.addf %17, %18 : vector<8x128xf32>
    %c0_17 = arith.constant 0 : index
    %c0_18 = arith.constant 0 : index
    %20 = vector.load %arg7[%c0_17, %c0_18] : memref<8x128xf32, #tpu.memory_space<vmem>>, vector<8x128xf32>
    tpu.vector_store %arg7[%c0_17, %c0_18], %19 {strides = array<i32>} : memref<8x128xf32, #tpu.memory_space<vmem>>, vector<8x128xf32>,
    return
  }
}

</mosaic_0001>

<llo_original>
// kernel: tpu_custom_call.1
$region0: #{tpu_custom_call.1}
  #allocation0 [shape = 'u32[]', space=smem, size = 0x4, offset = 0x4, fixed_abs, tag = 'smem constant byte address 0x4 - core index']
  #allocation1 [shape = 'u32[72,128]{1,0:T(1,128)}', space=vmem, size = 0x9000, scoped, tag = 'internal scratch']
  %s0 = inlined_call_operand.hbm [shape: f32[8,1024], index: 0, kind: input, shape index: {}]
  %s1 = inlined_call_operand.hbm [shape: f32[1024,256], index: 1, kind: input, shape index: {}]
  %s2 = inlined_call_operand.hbm [shape: f32[1,256], index: 2, kind: input, shape index: {}]
  %s3 = inlined_call_operand.hbm [shape: f32[256,256], index: 3, kind: input, shape index: {}]
  %s4 = inlined_call_operand.vmem [shape: f32[1,256], index: 4, kind: input, shape index: {}]
  %s5 = inlined_call_operand.hbm [shape: f32[256,128], index: 5, kind: input, shape index: {}]
  %s6 = inlined_call_operand.vmem [shape: f32[1,128], index: 6, kind: input, shape index: {}]
  %s7 = inlined_call_operand.hbm [shape: f32[8,128], index: 7, kind: output, shape index: {}]
  %s8 = sld [smem:[#allocation0]]
  $region58: #{tpu_custom_call.1} parent=0
    _
  %s10 = ssub.s32 1, %s8
  %s11 = scalar_select 0, %s10, %s8
  $region1: #{tpu_custom_call.1} parent=0
    #allocation2 [shape = 'u8[32768]{0}', space=vmem, size = 0x8000, scoped, tag = 'input window, operand 0, single buffered']
    #allocation3 [shape = 's32[1]{0}', space=sflag, size = 0x4, scoped, tag = 'scoped memory for tpu_custom_call.1']
    #allocation4 [shape = 's32[1]{0}', space=sflag, size = 0x4, scoped, tag = 'scoped memory for tpu_custom_call.1']
    #allocation5 [shape = 'u8[1048576]{0}', space=vmem, size = 0x100000, scoped, tag = 'input window, operand 1, single buffered']
    #allocation6 [shape = 's32[1]{0}', space=sflag, size = 0x4, scoped, tag = 'scoped memory for tpu_custom_call.1']
    #allocation7 [shape = 'u8[1024]{0}', space=vmem, size = 0x400, scoped, tag = 'input window, operand 2, single buffered']
    #allocation8 [shape = 'u8[262144]{0}', space=vmem, size = 0x40000, scoped, tag = 'input window, operand 3, single buffered']
    #allocation9 [shape = 's32[1]{0}', space=sflag, size = 0x4, scoped, tag = 'scoped memory for tpu_custom_call.1']
    #allocation10 [shape = 'u8[131072]{0}', space=vmem, size = 0x20000, scoped, tag = 'input window, operand 5, single buffered']
    #allocation11 [shape = 'u8[4096]{0}', space=vmem, size = 0x1000, scoped, tag = 'output window, operand 0, single buffered']
    %12 = vsyncpa [#allocation3], 0
    %13 = vsyncpa [#allocation6], 0
    %14 = vsyncpa [#allocation9], 0
    %15 = vsyncpa [#allocation4], 0
    // Predicated region
    $region2: #{tpu_custom_call.1} parent=1 // pred_check
      _
    $region3: #{tpu_custom_call.1} parent=1 // pred_check_branch
      %17 = sbr.rel (0) target = $region5
    $region4: #{tpu_custom_call.1} parent=1 // pred_region
      %19 = vsyncadd [#allocation3], 0
      %s21 = sshll.u32 %s0, 4
      %s22 = int_to_ptr.hbm [resolvable:$true] %s21
      %s23 = sshll.u32 [#allocation2], 4
      %s24 = int_to_ptr.vmem [resolvable:$true] %s23
      %26 = dma.hbm_to_vmem [thread:$0]  %s22, 1024, %s24, [#allocation3]
    $region5: #{tpu_custom_call.1} parent=1 // pred_fallthru
      _
    // Predicated region
    $region6: #{tpu_custom_call.1} parent=1 // pred_check
      _
    $region7: #{tpu_custom_call.1} parent=1 // pred_check_branch
      %28 = sbr.rel (0) target = $region9
    $region8: #{tpu_custom_call.1} parent=1 // pred_region
      %30 = vsyncadd [#allocation6], 0
      %s31 = sshll.u32 %s1, 4
      %s32 = int_to_ptr.hbm [resolvable:$true] %s31
      %s33 = sshll.u32 [#allocation5], 4
      %s34 = int_to_ptr.vmem [resolvable:$true] %s33
      %39 = dma.hbm_to_vmem [thread:$0]  %s32, 32768, %s34, [#allocation6], 256, 256, 16
    $region9: #{tpu_custom_call.1} parent=1 // pred_fallthru
      _
    // Predicated region
    $region10: #{tpu_custom_call.1} parent=1 // pred_check
      _
    $region11: #{tpu_custom_call.1} parent=1 // pred_check_branch
      %41 = sbr.rel (0) target = $region13
    $region12: #{tpu_custom_call.1} parent=1 // pred_region
      %43 = vsyncadd [#allocation6], 0
      %s45 = sshll.u32 %s2, 4
      %s46 = int_to_ptr.hbm [resolvable:$true] %s45
      %s47 = sshll.u32 [#allocation7], 4
      %s48 = int_to_ptr.vmem [resolvable:$true] %s47
      %50 = dma.hbm_to_vmem [thread:$0]  %s46, 32, %s48, [#allocation6]
    $region13: #{tpu_custom_call.1} parent=1 // pred_fallthru
      _
    // Predicated region
    $region14: #{tpu_custom_call.1} parent=1 // pred_check
      _
    $region15: #{tpu_custom_call.1} parent=1 // pred_check_branch
      %52 = sbr.rel (0) target = $region17
    $region16: #{tpu_custom_call.1} parent=1 // pred_region
      %54 = vsyncadd [#allocation9], 0
      %s55 = sshll.u32 %s3, 4
      %s56 = int_to_ptr.hbm [resolvable:$true] %s55
      %s57 = sshll.u32 [#allocation8], 4
      %s58 = int_to_ptr.vmem [resolvable:$true] %s57
      %63 = dma.hbm_to_vmem [thread:$0]  %s56, 8192, %s58, [#allocation9], 256, 256, 16
    $region17: #{tpu_custom_call.1} parent=1 // pred_fallthru
      _
    // Predicated region
    $region18: #{tpu_custom_call.1} parent=1 // pred_check
      _
    $region19: #{tpu_custom_call.1} parent=1 // pred_check_branch
      %65 = sbr.rel (0) target = $region21
    $region20: #{tpu_custom_call.1} parent=1 // pred_region
      _
    $region21: #{tpu_custom_call.1} parent=1 // pred_fallthru
      _
    // Predicated region
    $region22: #{tpu_custom_call.1} parent=1 // pred_check
      _
    $region23: #{tpu_custom_call.1} parent=1 // pred_check_branch
      %67 = sbr.rel (0) target = $region25
    $region24: #{tpu_custom_call.1} parent=1 // pred_region
      %69 = vsyncadd [#allocation9], 0
      %s70 = sshll.u32 %s5, 4
      %s71 = int_to_ptr.hbm [resolvable:$true] %s70
      %s72 = sshll.u32 [#allocation10], 4
      %s73 = int_to_ptr.vmem [resolvable:$true] %s72
      %78 = dma.hbm_to_vmem [thread:$0]  %s71, 4096, %s73, [#allocation9], 128, 128, 8
    $region25: #{tpu_custom_call.1} parent=1 // pred_fallthru
      _
    // Predicated region
    $region26: #{tpu_custom_call.1} parent=1 // pred_check
      _
    $region27: #{tpu_custom_call.1} parent=1 // pred_check_branch
      %80 = sbr.rel (0) target = $region29
    $region28: #{tpu_custom_call.1} parent=1 // pred_region
      _
    $region29: #{tpu_custom_call.1} parent=1 // pred_fallthru
      _
    // Predicated region
    $region30: #{tpu_custom_call.1} parent=1 // pred_check
      _
    $region31: #{tpu_custom_call.1} parent=1 // pred_check_branch
      %82 = sbr.rel (0) target = $region33
    $region32: #{tpu_custom_call.1} parent=1 // pred_region
      %84 = dma.done [#allocation3], 1024
    $region33: #{tpu_custom_call.1} parent=1 // pred_fallthru
      _
    // Predicated region
    $region34: #{tpu_custom_call.1} parent=1 // pred_check
      _
    $region35: #{tpu_custom_call.1} parent=1 // pred_check_branch
      %86 = sbr.rel (0) target = $region37
    $region36: #{tpu_custom_call.1} parent=1 // pred_region
      %88 = dma.done [#allocation6], 32768
    $region37: #{tpu_custom_call.1} parent=1 // pred_fallthru
      _
    // Predicated region
    $region38: #{tpu_custom_call.1} parent=1 // pred_check
      _
    $region39: #{tpu_custom_call.1} parent=1 // pred_check_branch
      %90 = sbr.rel (0) target = $region41
    $region40: #{tpu_custom_call.1} parent=1 // pred_region
      %92 = dma.done [#allocation6], 32
    $region41: #{tpu_custom_call.1} parent=1 // pred_fallthru
      _
    // Predicated region
    $region42: #{tpu_custom_call.1} parent=1 // pred_check
      _
    $region43: #{tpu_custom_call.1} parent=1 // pred_check_branch
      %94 = sbr.rel (0) target = $region45
    $region44: #{tpu_custom_call.1} parent=1 // pred_region
      %96 = dma.done [#allocation9], 8192
    $region45: #{tpu_custom_call.1} parent=1 // pred_fallthru
      _
    // Predicated region
    $region46: #{tpu_custom_call.1} parent=1 // pred_check
      _
    $region47: #{tpu_custom_call.1} parent=1 // pred_check_branch
      %98 = sbr.rel (0) target = $region49
    $region48: #{tpu_custom_call.1} parent=1 // pred_region
      %100 = dma.done [#allocation9], 4096
    $region49: #{tpu_custom_call.1} parent=1 // pred_fallthru
      _
    %v101 = vld [vmem:[#allocation2] sm:$0xff]
    %v102 = vld [vmem:[#allocation2 + $0x8] sm:$0xff]
    %v103 = vld [vmem:[#allocation2 + $0x10] sm:$0xff]
    %v104 = vld [vmem:[#allocation2 + $0x18] sm:$0xff]
    %v105 = vld [vmem:[#allocation2 + $0x20] sm:$0xff]
    %v106 = vld [vmem:[#allocation2 + $0x28] sm:$0xff]
    %v107 = vld [vmem:[#allocation2 + $0x30] sm:$0xff]
    %v108 = vld [vmem:[#allocation2 + $0x38] sm:$0xff]
    %v109 = vld [vmem:[#allocation5] sm:$0xff]
    %v110 = vld [vmem:[#allocation5 + $0x8] sm:$0xff]
    %v111 = vld [vmem:[#allocation5 + $0x10] sm:$0xff]
    %v112 = vld [vmem:[#allocation5 + $0x18] sm:$0xff]
    %v113 = vld [vmem:[#allocation5 + $0x20] sm:$0xff]
    %v114 = vld [vmem:[#allocation5 + $0x28] sm:$0xff]
    %v115 = vld [vmem:[#allocation5 + $0x30] sm:$0xff]
    %v116 = vld [vmem:[#allocation5 + $0x38] sm:$0xff]
    %v117 = vld [vmem:[#allocation5 + $0x40] sm:$0xff]
    %v118 = vld [vmem:[#allocation5 + $0x48] sm:$0xff]
    %v119 = vld [vmem:[#allocation5 + $0x50] sm:$0xff]
    %v120 = vld [vmem:[#allocation5 + $0x58] sm:$0xff]
    %v121 = vld [vmem:[#allocation5 + $0x60] sm:$0xff]
    %v122 = vld [vmem:[#allocation5 + $0x68] sm:$0xff]
    %v123 = vld [vmem:[#allocation5 + $0x70] sm:$0xff]
    %v124 = vld [vmem:[#allocation5 + $0x78] sm:$0xff]
    %v125 = vld [vmem:[#allocation5 + $0x80] sm:$0xff]
    %v126 = vld [vmem:[#allocation5 + $0x88] sm:$0xff]
    %v127 = vld [vmem:[#allocation5 + $0x90] sm:$0xff]
    %v128 = vld [vmem:[#allocation5 + $0x98] sm:$0xff]
    %v129 = vld [vmem:[#allocation5 + $0xa0] sm:$0xff]
    %v130 = vld [vmem:[#allocation5 + $0xa8] sm:$0xff]
    %v131 = vld [vmem:[#allocation5 + $0xb0] sm:$0xff]
    %v132 = vld [vmem:[#allocation5 + $0xb8] sm:$0xff]
    %v133 = vld [vmem:[#allocation5 + $0xc0] sm:$0xff]
    %v134 = vld [vmem:[#allocation5 + $0xc8] sm:$0xff]
    %v135 = vld [vmem:[#allocation5 + $0xd0] sm:$0xff]
    %v136 = vld [vmem:[#allocation5 + $0xd8] sm:$0xff]
    %v137 = vld [vmem:[#allocation5 + $0xe0] sm:$0xff]
    %v138 = vld [vmem:[#allocation5 + $0xe8] sm:$0xff]
    %v139 = vld [vmem:[#allocation5 + $0xf0] sm:$0xff]
    %v140 = vld [vmem:[#allocation5 + $0xf8] sm:$0xff]
    %v141 = vld [vmem:[#allocation5 + $0x100] sm:$0xff]
    %v142 = vld [vmem:[#allocation5 + $0x108] sm:$0xff]
    %v143 = vld [vmem:[#allocation5 + $0x110] sm:$0xff]
    %v144 = vld [vmem:[#allocation5 + $0x118] sm:$0xff]
    %v145 = vld [vmem:[#allocation5 + $0x120] sm:$0xff]
    %v146 = vld [vmem:[#allocation5 + $0x128] sm:$0xff]
    %v147 = vld [vmem:[#allocation5 + $0x130] sm:$0xff]
    %v148 = vld [vmem:[#allocation5 + $0x138] sm:$0xff]
    %v149 = vld [vmem:[#allocation5 + $0x140] sm:$0xff]
    %v150 = vld [vmem:[#allocation5 + $0x148] sm:$0xff]
    %v151 = vld [vmem:[#allocation5 + $0x150] sm:$0xff]
    %v152 = vld [vmem:[#allocation5 + $0x158] sm:$0xff]
    %v153 = vld [vmem:[#allocation5 + $0x160] sm:$0xff]
    %v154 = vld [vmem:[#allocation5 + $0x168] sm:$0xff]
    %v155 = vld [vmem:[#allocation5 + $0x170] sm:$0xff]
    %v156 = vld [vmem:[#allocation5 + $0x178] sm:$0xff]
    %v157 = vld [vmem:[#allocation5 + $0x180] sm:$0xff]
    %v158 = vld [vmem:[#allocation5 + $0x188] sm:$0xff]
    %v159 = vld [vmem:[#allocation5 + $0x190] sm:$0xff]
    %v160 = vld [vmem:[#allocation5 + $0x198] sm:$0xff]
    %v161 = vld [vmem:[#allocation5 + $0x1a0] sm:$0xff]
    %v162 = vld [vmem:[#allocation5 + $0x1a8] sm:$0xff]
    %v163 = vld [vmem:[#allocation5 + $0x1b0] sm:$0xff]
    %v164 = vld [vmem:[#allocation5 + $0x1b8] sm:$0xff]
    %v165 = vld [vmem:[#allocation5 + $0x1c0] sm:$0xff]
    %v166 = vld [vmem:[#allocation5 + $0x1c8] sm:$0xff]
    %v167 = vld [vmem:[#allocation5 + $0x1d0] sm:$0xff]
    %v168 = vld [vmem:[#allocation5 + $0x1d8] sm:$0xff]
    %v169 = vld [vmem:[#allocation5 + $0x1e0] sm:$0xff]
    %v170 = vld [vmem:[#allocation5 + $0x1e8] sm:$0xff]
    %v171 = vld [vmem:[#allocation5 + $0x1f0] sm:$0xff]
    %v172 = vld [vmem:[#allocation5 + $0x1f8] sm:$0xff]
    %v173 = vld [vmem:[#allocation5 + $0x200] sm:$0xff]
    %v174 = vld [vmem:[#allocation5 + $0x208] sm:$0xff]
    %v175 = vld [vmem:[#allocation5 + $0x210] sm:$0xff]
    %v176 = vld [vmem:[#allocation5 + $0x218] sm:$0xff]
    %v177 = vld [vmem:[#allocation5 + $0x220] sm:$0xff]
    %v178 = vld [vmem:[#allocation5 + $0x228] sm:$0xff]
    %v179 = vld [vmem:[#allocation5 + $0x230] sm:$0xff]
    %v180 = vld [vmem:[#allocation5 + $0x238] sm:$0xff]
    %v181 = vld [vmem:[#allocation5 + $0x240] sm:$0xff]
    %v182 = vld [vmem:[#allocation5 + $0x248] sm:$0xff]
    %v183 = vld [vmem:[#allocation5 + $0x250] sm:$0xff]
    %v184 = vld [vmem:[#allocation5 + $0x258] sm:$0xff]
    %v185 = vld [vmem:[#allocation5 + $0x260] sm:$0xff]
    %v186 = vld [vmem:[#allocation5 + $0x268] sm:$0xff]
    %v187 = vld [vmem:[#allocation5 + $0x270] sm:$0xff]
    %v188 = vld [vmem:[#allocation5 + $0x278] sm:$0xff]
    %v189 = vld [vmem:[#allocation5 + $0x280] sm:$0xff]
    %v190 = vld [vmem:[#allocation5 + $0x288] sm:$0xff]
    %v191 = vld [vmem:[#allocation5 + $0x290] sm:$0xff]
    %v192 = vld [vmem:[#allocation5 + $0x298] sm:$0xff]
    %v193 = vld [vmem:[#allocation5 + $0x2a0] sm:$0xff]
    %v194 = vld [vmem:[#allocation5 + $0x2a8] sm:$0xff]
    %v195 = vld [vmem:[#allocation5 + $0x2b0] sm:$0xff]
    %v196 = vld [vmem:[#allocation5 + $0x2b8] sm:$0xff]
    %v197 = vld [vmem:[#allocation5 + $0x2c0] sm:$0xff]
    %v198 = vld [vmem:[#allocation5 + $0x2c8] sm:$0xff]
    %v199 = vld [vmem:[#allocation5 + $0x2d0] sm:$0xff]
    %v200 = vld [vmem:[#allocation5 + $0x2d8] sm:$0xff]
    %v201 = vld [vmem:[#allocation5 + $0x2e0] sm:$0xff]
    %v202 = vld [vmem:[#allocation5 + $0x2e8] sm:$0xff]
    %v203 = vld [vmem:[#allocation5 + $0x2f0] sm:$0xff]
    %v204 = vld [vmem:[#allocation5 + $0x2f8] sm:$0xff]
    %v205 = vld [vmem:[#allocation5 + $0x300] sm:$0xff]
    %v206 = vld [vmem:[#allocation5 + $0x308] sm:$0xff]
    %v207 = vld [vmem:[#allocation5 + $0x310] sm:$0xff]
    %v208 = vld [vmem:[#allocation5 + $0x318] sm:$0xff]
    %v209 = vld [vmem:[#allocation5 + $0x320] sm:$0xff]
    %v210 = vld [vmem:[#allocation5 + $0x328] sm:$0xff]
    %v211 = vld [vmem:[#allocation5 + $0x330] sm:$0xff]
    %v212 = vld [vmem:[#allocation5 + $0x338] sm:$0xff]
    %v213 = vld [vmem:[#allocation5 + $0x340] sm:$0xff]
    %v214 = vld [vmem:[#allocation5 + $0x348] sm:$0xff]
    %v215 = vld [vmem:[#allocation5 + $0x350] sm:$0xff]
    %v216 = vld [vmem:[#allocation5 + $0x358] sm:$0xff]
    %v217 = vld [vmem:[#allocation5 + $0x360] sm:$0xff]
    %v218 = vld [vmem:[#allocation5 + $0x368] sm:$0xff]
    %v219 = vld [vmem:[#allocation5 + $0x370] sm:$0xff]
    %v220 = vld [vmem:[#allocation5 + $0x378] sm:$0xff]
    %v221 = vld [vmem:[#allocation5 + $0x380] sm:$0xff]
    %v222 = vld [vmem:[#allocation5 + $0x388] sm:$0xff]
    %v223 = vld [vmem:[#allocation5 + $0x390] sm:$0xff]
    %v224 = vld [vmem:[#allocation5 + $0x398] sm:$0xff]
    %v225 = vld [vmem:[#allocation5 + $0x3a0] sm:$0xff]
    %v226 = vld [vmem:[#allocation5 + $0x3a8] sm:$0xff]
    %v227 = vld [vmem:[#allocation5 + $0x3b0] sm:$0xff]
    %v228 = vld [vmem:[#allocation5 + $0x3b8] sm:$0xff]
    %v229 = vld [vmem:[#allocation5 + $0x3c0] sm:$0xff]
    %v230 = vld [vmem:[#allocation5 + $0x3c8] sm:$0xff]
    %v231 = vld [vmem:[#allocation5 + $0x3d0] sm:$0xff]
    %v232 = vld [vmem:[#allocation5 + $0x3d8] sm:$0xff]
    %v233 = vld [vmem:[#allocation5 + $0x3e0] sm:$0xff]
    %v234 = vld [vmem:[#allocation5 + $0x3e8] sm:$0xff]
    %v235 = vld [vmem:[#allocation5 + $0x3f0] sm:$0xff]
    %v236 = vld [vmem:[#allocation5 + $0x3f8] sm:$0xff]
    %v237 = vld [vmem:[#allocation5 + $0x400] sm:$0xff]
    %v238 = vld [vmem:[#allocation5 + $0x408] sm:$0xff]
    %v239 = vld [vmem:[#allocation5 + $0x410] sm:$0xff]
    %v240 = vld [vmem:[#allocation5 + $0x418] sm:$0xff]
    %v241 = vld [vmem:[#allocation5 + $0x420] sm:$0xff]
    %v242 = vld [vmem:[#allocation5 + $0x428] sm:$0xff]
    %v243 = vld [vmem:[#allocation5 + $0x430] sm:$0xff]
    %v244 = vld [vmem:[#allocation5 + $0x438] sm:$0xff]
    %v245 = vld [vmem:[#allocation5 + $0x440] sm:$0xff]
    %v246 = vld [vmem:[#allocation5 + $0x448] sm:$0xff]
    %v247 = vld [vmem:[#allocation5 + $0x450] sm:$0xff]
    %v248 = vld [vmem:[#allocation5 + $0x458] sm:$0xff]
    %v249 = vld [vmem:[#allocation5 + $0x460] sm:$0xff]
    %v250 = vld [vmem:[#allocation5 + $0x468] sm:$0xff]
    %v251 = vld [vmem:[#allocation5 + $0x470] sm:$0xff]
    %v252 = vld [vmem:[#allocation5 + $0x478] sm:$0xff]
    %v253 = vld [vmem:[#allocation5 + $0x480] sm:$0xff]
    %v254 = vld [vmem:[#allocation5 + $0x488] sm:$0xff]
    %v255 = vld [vmem:[#allocation5 + $0x490] sm:$0xff]
    %v256 = vld [vmem:[#allocation5 + $0x498] sm:$0xff]
    %v257 = vld [vmem:[#allocation5 + $0x4a0] sm:$0xff]
    %v258 = vld [vmem:[#allocation5 + $0x4a8] sm:$0xff]
    %v259 = vld [vmem:[#allocation5 + $0x4b0] sm:$0xff]
    %v260 = vld [vmem:[#allocation5 + $0x4b8] sm:$0xff]
    %v261 = vld [vmem:[#allocation5 + $0x4c0] sm:$0xff]
    %v262 = vld [vmem:[#allocation5 + $0x4c8] sm:$0xff]
    %v263 = vld [vmem:[#allocation5 + $0x4d0] sm:$0xff]
    %v264 = vld [vmem:[#allocation5 + $0x4d8] sm:$0xff]
    %v265 = vld [vmem:[#allocation5 + $0x4e0] sm:$0xff]
    %v266 = vld [vmem:[#allocation5 + $0x4e8] sm:$0xff]
    %v267 = vld [vmem:[#allocation5 + $0x4f0] sm:$0xff]
    %v268 = vld [vmem:[#allocation5 + $0x4f8] sm:$0xff]
    %v269 = vld [vmem:[#allocation5 + $0x500] sm:$0xff]
    %v270 = vld [vmem:[#allocation5 + $0x508] sm:$0xff]
    %v271 = vld [vmem:[#allocation5 + $0x510] sm:$0xff]
    %v272 = vld [vmem:[#allocation5 + $0x518] sm:$0xff]
    %v273 = vld [vmem:[#allocation5 + $0x520] sm:$0xff]
    %v274 = vld [vmem:[#allocation5 + $0x528] sm:$0xff]
    %v275 = vld [vmem:[#allocation5 + $0x530] sm:$0xff]
    %v276 = vld [vmem:[#allocation5 + $0x538] sm:$0xff]
    %v277 = vld [vmem:[#allocation5 + $0x540] sm:$0xff]
    %v278 = vld [vmem:[#allocation5 + $0x548] sm:$0xff]
    %v279 = vld [vmem:[#allocation5 + $0x550] sm:$0xff]
    %v280 = vld [vmem:[#allocation5 + $0x558] sm:$0xff]
    %v281 = vld [vmem:[#allocation5 + $0x560] sm:$0xff]
    %v282 = vld [vmem:[#allocation5 + $0x568] sm:$0xff]
    %v283 = vld [vmem:[#allocation5 + $0x570] sm:$0xff]
    %v284 = vld [vmem:[#allocation5 + $0x578] sm:$0xff]
    %v285 = vld [vmem:[#allocation5 + $0x580] sm:$0xff]
    %v286 = vld [vmem:[#allocation5 + $0x588] sm:$0xff]
    %v287 = vld [vmem:[#allocation5 + $0x590] sm:$0xff]
    %v288 = vld [vmem:[#allocation5 + $0x598] sm:$0xff]
    %v289 = vld [vmem:[#allocation5 + $0x5a0] sm:$0xff]
    %v290 = vld [vmem:[#allocation5 + $0x5a8] sm:$0xff]
    %v291 = vld [vmem:[#allocation5 + $0x5b0] sm:$0xff]
    %v292 = vld [vmem:[#allocation5 + $0x5b8] sm:$0xff]
    %v293 = vld [vmem:[#allocation5 + $0x5c0] sm:$0xff]
    %v294 = vld [vmem:[#allocation5 + $0x5c8] sm:$0xff]
    %v295 = vld [vmem:[#allocation5 + $0x5d0] sm:$0xff]
    %v296 = vld [vmem:[#allocation5 + $0x5d8] sm:$0xff]
    %v297 = vld [vmem:[#allocation5 + $0x5e0] sm:$0xff]
    %v298 = vld [vmem:[#allocation5 + $0x5e8] sm:$0xff]
    %v299 = vld [vmem:[#allocation5 + $0x5f0] sm:$0xff]
    %v300 = vld [vmem:[#allocation5 + $0x5f8] sm:$0xff]
    %v301 = vld [vmem:[#allocation5 + $0x600] sm:$0xff]
    %v302 = vld [vmem:[#allocation5 + $0x608] sm:$0xff]
    %v303 = vld [vmem:[#allocation5 + $0x610] sm:$0xff]
    %v304 = vld [vmem:[#allocation5 + $0x618] sm:$0xff]
    %v305 = vld [vmem:[#allocation5 + $0x620] sm:$0xff]
    %v306 = vld [vmem:[#allocation5 + $0x628] sm:$0xff]
    %v307 = vld [vmem:[#allocation5 + $0x630] sm:$0xff]
    %v308 = vld [vmem:[#allocation5 + $0x638] sm:$0xff]
    %v309 = vld [vmem:[#allocation5 + $0x640] sm:$0xff]
    %v310 = vld [vmem:[#allocation5 + $0x648] sm:$0xff]
    %v311 = vld [vmem:[#allocation5 + $0x650] sm:$0xff]
    %v312 = vld [vmem:[#allocation5 + $0x658] sm:$0xff]
    %v313 = vld [vmem:[#allocation5 + $0x660] sm:$0xff]
    %v314 = vld [vmem:[#allocation5 + $0x668] sm:$0xff]
    %v315 = vld [vmem:[#allocation5 + $0x670] sm:$0xff]
    %v316 = vld [vmem:[#allocation5 + $0x678] sm:$0xff]
    %v317 = vld [vmem:[#allocation5 + $0x680] sm:$0xff]
    %v318 = vld [vmem:[#allocation5 + $0x688] sm:$0xff]
    %v319 = vld [vmem:[#allocation5 + $0x690] sm:$0xff]
    %v320 = vld [vmem:[#allocation5 + $0x698] sm:$0xff]
    %v321 = vld [vmem:[#allocation5 + $0x6a0] sm:$0xff]
    %v322 = vld [vmem:[#allocation5 + $0x6a8] sm:$0xff]
    %v323 = vld [vmem:[#allocation5 + $0x6b0] sm:$0xff]
    %v324 = vld [vmem:[#allocation5 + $0x6b8] sm:$0xff]
    %v325 = vld [vmem:[#allocation5 + $0x6c0] sm:$0xff]
    %v326 = vld [vmem:[#allocation5 + $0x6c8] sm:$0xff]
    %v327 = vld [vmem:[#allocation5 + $0x6d0] sm:$0xff]
    %v328 = vld [vmem:[#allocation5 + $0x6d8] sm:$0xff]
    %v329 = vld [vmem:[#allocation5 + $0x6e0] sm:$0xff]
    %v330 = vld [vmem:[#allocation5 + $0x6e8] sm:$0xff]
    %v331 = vld [vmem:[#allocation5 + $0x6f0] sm:$0xff]
    %v332 = vld [vmem:[#allocation5 + $0x6f8] sm:$0xff]
    %v333 = vld [vmem:[#allocation5 + $0x700] sm:$0xff]
    %v334 = vld [vmem:[#allocation5 + $0x708] sm:$0xff]
    %v335 = vld [vmem:[#allocation5 + $0x710] sm:$0xff]
    %v336 = vld [vmem:[#allocation5 + $0x718] sm:$0xff]
    %v337 = vld [vmem:[#allocation5 + $0x720] sm:$0xff]
    %v338 = vld [vmem:[#allocation5 + $0x728] sm:$0xff]
    %v339 = vld [vmem:[#allocation5 + $0x730] sm:$0xff]
    %v340 = vld [vmem:[#allocation5 + $0x738] sm:$0xff]
    %v341 = vld [vmem:[#allocation5 + $0x740] sm:$0xff]
    %v342 = vld [vmem:[#allocation5 + $0x748] sm:$0xff]
    %v343 = vld [vmem:[#allocation5 + $0x750] sm:$0xff]
    %v344 = vld [vmem:[#allocation5 + $0x758] sm:$0xff]
    %v345 = vld [vmem:[#allocation5 + $0x760] sm:$0xff]
    %v346 = vld [vmem:[#allocation5 + $0x768] sm:$0xff]
    %v347 = vld [vmem:[#allocation5 + $0x770] sm:$0xff]
    %v348 = vld [vmem:[#allocation5 + $0x778] sm:$0xff]
    %v349 = vld [vmem:[#allocation5 + $0x780] sm:$0xff]
    %v350 = vld [vmem:[#allocation5 + $0x788] sm:$0xff]
    %v351 = vld [vmem:[#allocation5 + $0x790] sm:$0xff]
    %v352 = vld [vmem:[#allocation5 + $0x798] sm:$0xff]
    %v353 = vld [vmem:[#allocation5 + $0x7a0] sm:$0xff]
    %v354 = vld [vmem:[#allocation5 + $0x7a8] sm:$0xff]
    %v355 = vld [vmem:[#allocation5 + $0x7b0] sm:$0xff]
    %v356 = vld [vmem:[#allocation5 + $0x7b8] sm:$0xff]
    %v357 = vld [vmem:[#allocation5 + $0x7c0] sm:$0xff]
    %v358 = vld [vmem:[#allocation5 + $0x7c8] sm:$0xff]
    %v359 = vld [vmem:[#allocation5 + $0x7d0] sm:$0xff]
    %v360 = vld [vmem:[#allocation5 + $0x7d8] sm:$0xff]
    %v361 = vld [vmem:[#allocation5 + $0x7e0] sm:$0xff]
    %v362 = vld [vmem:[#allocation5 + $0x7e8] sm:$0xff]
    %v363 = vld [vmem:[#allocation5 + $0x7f0] sm:$0xff]
    %v364 = vld [vmem:[#allocation5 + $0x7f8] sm:$0xff]
    %v365 = vld [vmem:[#allocation7] sm:$0x3]
    %v367 = vperm.slane %v365, 0
    %v368 = vperm.slane %v365, 1
    %371 = vmatpush.msra.mxu0 %v139
    %372 = vmatpush.msra.mxu0 %v137
    %373 = vmatpush.msra.mxu0 %v135
    %374 = vmatpush.msra.mxu0 %v133
    %375 = vmatpush.msra.mxu0 %v131
    %376 = vmatpush.msra.mxu0 %v129
    %377 = vmatpush.msra.mxu0 %v127
    %378 = vmatpush.msra.mxu0 %v125
    %379 = vmatpush.msra.mxu0 %v123
    %380 = vmatpush.msra.mxu0 %v121
    %381 = vmatpush.msra.mxu0 %v119
    %382 = vmatpush.msra.mxu0 %v117
    %383 = vmatpush.msra.mxu0 %v115
    %384 = vmatpush.msra.mxu0 %v113
    %385 = vmatpush.msra.mxu0 %v111
    %386 = vmatpush.msra.mxu0 %v109
    %387 = vmatmul.f32.gmra.mxu0 %v101
    %v388 = vpop.f32.mrf.mxu0
    %v389 = vadd.f32 %v367, %v388
    %390 = vdwg.mxu0
    %391 = vmatpush.msra.mxu0 %v171
    %392 = vmatpush.msra.mxu0 %v169
    %393 = vmatpush.msra.mxu0 %v167
    %394 = vmatpush.msra.mxu0 %v165
    %395 = vmatpush.msra.mxu0 %v163
    %396 = vmatpush.msra.mxu0 %v161
    %397 = vmatpush.msra.mxu0 %v159
    %398 = vmatpush.msra.mxu0 %v157
    %399 = vmatpush.msra.mxu0 %v155
    %400 = vmatpush.msra.mxu0 %v153
    %401 = vmatpush.msra.mxu0 %v151
    %402 = vmatpush.msra.mxu0 %v149
    %403 = vmatpush.msra.mxu0 %v147
    %404 = vmatpush.msra.mxu0 %v145
    %405 = vmatpush.msra.mxu0 %v143
    %406 = vmatpush.msra.mxu0 %v141
    %407 = vmatmul.f32.gmra.mxu0 %v102
    %v408 = vpop.f32.mrf.mxu0
    %v409 = vadd.f32 %v389, %v408
    %410 = vdwg.mxu0
    %411 = vmatpush.msra.mxu0 %v203
    %412 = vmatpush.msra.mxu0 %v201
    %413 = vmatpush.msra.mxu0 %v199
    %414 = vmatpush.msra.mxu0 %v197
    %415 = vmatpush.msra.mxu0 %v195
    %416 = vmatpush.msra.mxu0 %v193
    %417 = vmatpush.msra.mxu0 %v191
    %418 = vmatpush.msra.mxu0 %v189
    %419 = vmatpush.msra.mxu0 %v187
    %420 = vmatpush.msra.mxu0 %v185
    %421 = vmatpush.msra.mxu0 %v183
    %422 = vmatpush.msra.mxu0 %v181
    %423 = vmatpush.msra.mxu0 %v179
    %424 = vmatpush.msra.mxu0 %v177
    %425 = vmatpush.msra.mxu0 %v175
    %426 = vmatpush.msra.mxu0 %v173
    %427 = vmatmul.f32.gmra.mxu0 %v103
    %v428 = vpop.f32.mrf.mxu0
    %v429 = vadd.f32 %v409, %v428
    %430 = vdwg.mxu0
    %431 = vmatpush.msra.mxu0 %v235
    %432 = vmatpush.msra.mxu0 %v233
    %433 = vmatpush.msra.mxu0 %v231
    %434 = vmatpush.msra.mxu0 %v229
    %435 = vmatpush.msra.mxu0 %v227
    %436 = vmatpush.msra.mxu0 %v225
    %437 = vmatpush.msra.mxu0 %v223
    %438 = vmatpush.msra.mxu0 %v221
    %439 = vmatpush.msra.mxu0 %v219
    %440 = vmatpush.msra.mxu0 %v217
    %441 = vmatpush.msra.mxu0 %v215
    %442 = vmatpush.msra.mxu0 %v213
    %443 = vmatpush.msra.mxu0 %v211
    %444 = vmatpush.msra.mxu0 %v209
    %445 = vmatpush.msra.mxu0 %v207
    %446 = vmatpush.msra.mxu0 %v205
    %447 = vmatmul.f32.gmra.mxu0 %v104
    %v448 = vpop.f32.mrf.mxu0
    %v449 = vadd.f32 %v429, %v448
    %450 = vdwg.mxu0
    %451 = vmatpush.msra.mxu0 %v267
    %452 = vmatpush.msra.mxu0 %v265
    %453 = vmatpush.msra.mxu0 %v263
    %454 = vmatpush.msra.mxu0 %v261
    %455 = vmatpush.msra.mxu0 %v259
    %456 = vmatpush.msra.mxu0 %v257
    %457 = vmatpush.msra.mxu0 %v255
    %458 = vmatpush.msra.mxu0 %v253
    %459 = vmatpush.msra.mxu0 %v251
    %460 = vmatpush.msra.mxu0 %v249
    %461 = vmatpush.msra.mxu0 %v247
    %462 = vmatpush.msra.mxu0 %v245
    %463 = vmatpush.msra.mxu0 %v243
    %464 = vmatpush.msra.mxu0 %v241
    %465 = vmatpush.msra.mxu0 %v239
    %466 = vmatpush.msra.mxu0 %v237
    %467 = vmatmul.f32.gmra.mxu0 %v105
    %v468 = vpop.f32.mrf.mxu0
    %v469 = vadd.f32 %v449, %v468
    %470 = vdwg.mxu0
    %471 = vmatpush.msra.mxu0 %v299
    %472 = vmatpush.msra.mxu0 %v297
    %473 = vmatpush.msra.mxu0 %v295
    %474 = vmatpush.msra.mxu0 %v293
    %475 = vmatpush.msra.mxu0 %v291
    %476 = vmatpush.msra.mxu0 %v289
    %477 = vmatpush.msra.mxu0 %v287
    %478 = vmatpush.msra.mxu0 %v285
    %479 = vmatpush.msra.mxu0 %v283
    %480 = vmatpush.msra.mxu0 %v281
    %481 = vmatpush.msra.mxu0 %v279
    %482 = vmatpush.msra.mxu0 %v277
    %483 = vmatpush.msra.mxu0 %v275
    %484 = vmatpush.msra.mxu0 %v273
    %485 = vmatpush.msra.mxu0 %v271
    %486 = vmatpush.msra.mxu0 %v269
    %487 = vmatmul.f32.gmra.mxu0 %v106
    %v488 = vpop.f32.mrf.mxu0
    %v489 = vadd.f32 %v469, %v488
    %490 = vdwg.mxu0
    %491 = vmatpush.msra.mxu0 %v331
    %492 = vmatpush.msra.mxu0 %v329
    %493 = vmatpush.msra.mxu0 %v327
    %494 = vmatpush.msra.mxu0 %v325
    %495 = vmatpush.msra.mxu0 %v323
    %496 = vmatpush.msra.mxu0 %v321
    %497 = vmatpush.msra.mxu0 %v319
    %498 = vmatpush.msra.mxu0 %v317
    %499 = vmatpush.msra.mxu0 %v315
    %500 = vmatpush.msra.mxu0 %v313
    %501 = vmatpush.msra.mxu0 %v311
    %502 = vmatpush.msra.mxu0 %v309
    %503 = vmatpush.msra.mxu0 %v307
    %504 = vmatpush.msra.mxu0 %v305
    %505 = vmatpush.msra.mxu0 %v303
    %506 = vmatpush.msra.mxu0 %v301
    %507 = vmatmul.f32.gmra.mxu0 %v107
    %v508 = vpop.f32.mrf.mxu0
    %v509 = vadd.f32 %v489, %v508
    %510 = vdwg.mxu0
    %511 = vmatpush.msra.mxu0 %v363
    %512 = vmatpush.msra.mxu0 %v361
    %513 = vmatpush.msra.mxu0 %v359
    %514 = vmatpush.msra.mxu0 %v357
    %515 = vmatpush.msra.mxu0 %v355
    %516 = vmatpush.msra.mxu0 %v353
    %517 = vmatpush.msra.mxu0 %v351
    %518 = vmatpush.msra.mxu0 %v349
    %519 = vmatpush.msra.mxu0 %v347
    %520 = vmatpush.msra.mxu0 %v345
    %521 = vmatpush.msra.mxu0 %v343
    %522 = vmatpush.msra.mxu0 %v341
    %523 = vmatpush.msra.mxu0 %v339
    %524 = vmatpush.msra.mxu0 %v337
    %525 = vmatpush.msra.mxu0 %v335
    %526 = vmatpush.msra.mxu0 %v333
    %527 = vmatmul.f32.gmra.mxu0 %v108
    %v528 = vpop.f32.mrf.mxu0
    %v529 = vadd.f32 %v509, %v528
    %530 = vdwg.mxu0
    %531 = vmatpush.msra.mxu0 %v140
    %532 = vmatpush.msra.mxu0 %v138
    %533 = vmatpush.msra.mxu0 %v136
    %534 = vmatpush.msra.mxu0 %v134
    %535 = vmatpush.msra.mxu0 %v132
    %536 = vmatpush.msra.mxu0 %v130
    %537 = vmatpush.msra.mxu0 %v128
    %538 = vmatpush.msra.mxu0 %v126
    %539 = vmatpush.msra.mxu0 %v124
    %540 = vmatpush.msra.mxu0 %v122
    %541 = vmatpush.msra.mxu0 %v120
    %542 = vmatpush.msra.mxu0 %v118
    %543 = vmatpush.msra.mxu0 %v116
    %544 = vmatpush.msra.mxu0 %v114
    %545 = vmatpush.msra.mxu0 %v112
    %546 = vmatpush.msra.mxu0 %v110
    %547 = vmatmul.f32.gmra.mxu0 %v101
    %v548 = vpop.f32.mrf.mxu0
    %v549 = vadd.f32 %v368, %v548
    %550 = vdwg.mxu0
    %551 = vmatpush.msra.mxu0 %v172
    %552 = vmatpush.msra.mxu0 %v170
    %553 = vmatpush.msra.mxu0 %v168
    %554 = vmatpush.msra.mxu0 %v166
    %555 = vmatpush.msra.mxu0 %v164
    %556 = vmatpush.msra.mxu0 %v162
    %557 = vmatpush.msra.mxu0 %v160
    %558 = vmatpush.msra.mxu0 %v158
    %559 = vmatpush.msra.mxu0 %v156
    %560 = vmatpush.msra.mxu0 %v154
    %561 = vmatpush.msra.mxu0 %v152
    %562 = vmatpush.msra.mxu0 %v150
    %563 = vmatpush.msra.mxu0 %v148
    %564 = vmatpush.msra.mxu0 %v146
    %565 = vmatpush.msra.mxu0 %v144
    %566 = vmatpush.msra.mxu0 %v142
    %567 = vmatmul.f32.gmra.mxu0 %v102
    %v568 = vpop.f32.mrf.mxu0
    %v569 = vadd.f32 %v549, %v568
    %570 = vdwg.mxu0
    %571 = vmatpush.msra.mxu0 %v204
    %572 = vmatpush.msra.mxu0 %v202
    %573 = vmatpush.msra.mxu0 %v200
    %574 = vmatpush.msra.mxu0 %v198
    %575 = vmatpush.msra.mxu0 %v196
    %576 = vmatpush.msra.mxu0 %v194
    %577 = vmatpush.msra.mxu0 %v192
    %578 = vmatpush.msra.mxu0 %v190
    %579 = vmatpush.msra.mxu0 %v188
    %580 = vmatpush.msra.mxu0 %v186
    %581 = vmatpush.msra.mxu0 %v184
    %582 = vmatpush.msra.mxu0 %v182
    %583 = vmatpush.msra.mxu0 %v180
    %584 = vmatpush.msra.mxu0 %v178
    %585 = vmatpush.msra.mxu0 %v176
    %586 = vmatpush.msra.mxu0 %v174
    %587 = vmatmul.f32.gmra.mxu0 %v103
    %v588 = vpop.f32.mrf.mxu0
    %v589 = vadd.f32 %v569, %v588
    %590 = vdwg.mxu0
    %591 = vmatpush.msra.mxu0 %v236
    %592 = vmatpush.msra.mxu0 %v234
    %593 = vmatpush.msra.mxu0 %v232
    %594 = vmatpush.msra.mxu0 %v230
    %595 = vmatpush.msra.mxu0 %v228
    %596 = vmatpush.msra.mxu0 %v226
    %597 = vmatpush.msra.mxu0 %v224
    %598 = vmatpush.msra.mxu0 %v222
    %599 = vmatpush.msra.mxu0 %v220
    %600 = vmatpush.msra.mxu0 %v218
    %601 = vmatpush.msra.mxu0 %v216
    %602 = vmatpush.msra.mxu0 %v214
    %603 = vmatpush.msra.mxu0 %v212
    %604 = vmatpush.msra.mxu0 %v210
    %605 = vmatpush.msra.mxu0 %v208
    %606 = vmatpush.msra.mxu0 %v206
    %607 = vmatmul.f32.gmra.mxu0 %v104
    %v608 = vpop.f32.mrf.mxu0
    %v609 = vadd.f32 %v589, %v608
    %610 = vdwg.mxu0
    %611 = vmatpush.msra.mxu0 %v268
    %612 = vmatpush.msra.mxu0 %v266
    %613 = vmatpush.msra.mxu0 %v264
    %614 = vmatpush.msra.mxu0 %v262
    %615 = vmatpush.msra.mxu0 %v260
    %616 = vmatpush.msra.mxu0 %v258
    %617 = vmatpush.msra.mxu0 %v256
    %618 = vmatpush.msra.mxu0 %v254
    %619 = vmatpush.msra.mxu0 %v252
    %620 = vmatpush.msra.mxu0 %v250
    %621 = vmatpush.msra.mxu0 %v248
    %622 = vmatpush.msra.mxu0 %v246
    %623 = vmatpush.msra.mxu0 %v244
    %624 = vmatpush.msra.mxu0 %v242
    %625 = vmatpush.msra.mxu0 %v240
    %626 = vmatpush.msra.mxu0 %v238
    %627 = vmatmul.f32.gmra.mxu0 %v105
    %v628 = vpop.f32.mrf.mxu0
    %v629 = vadd.f32 %v609, %v628
    %630 = vdwg.mxu0
    %631 = vmatpush.msra.mxu0 %v300
    %632 = vmatpush.msra.mxu0 %v298
    %633 = vmatpush.msra.mxu0 %v296
    %634 = vmatpush.msra.mxu0 %v294
    %635 = vmatpush.msra.mxu0 %v292
    %636 = vmatpush.msra.mxu0 %v290
    %637 = vmatpush.msra.mxu0 %v288
    %638 = vmatpush.msra.mxu0 %v286
    %639 = vmatpush.msra.mxu0 %v284
    %640 = vmatpush.msra.mxu0 %v282
    %641 = vmatpush.msra.mxu0 %v280
    %642 = vmatpush.msra.mxu0 %v278
    %643 = vmatpush.msra.mxu0 %v276
    %644 = vmatpush.msra.mxu0 %v274
    %645 = vmatpush.msra.mxu0 %v272
    %646 = vmatpush.msra.mxu0 %v270
    %647 = vmatmul.f32.gmra.mxu0 %v106
    %v648 = vpop.f32.mrf.mxu0
    %v649 = vadd.f32 %v629, %v648
    %650 = vdwg.mxu0
    %651 = vmatpush.msra.mxu0 %v332
    %652 = vmatpush.msra.mxu0 %v330
    %653 = vmatpush.msra.mxu0 %v328
    %654 = vmatpush.msra.mxu0 %v326
    %655 = vmatpush.msra.mxu0 %v324
    %656 = vmatpush.msra.mxu0 %v322
    %657 = vmatpush.msra.mxu0 %v320
    %658 = vmatpush.msra.mxu0 %v318
    %659 = vmatpush.msra.mxu0 %v316
    %660 = vmatpush.msra.mxu0 %v314
    %661 = vmatpush.msra.mxu0 %v312
    %662 = vmatpush.msra.mxu0 %v310
    %663 = vmatpush.msra.mxu0 %v308
    %664 = vmatpush.msra.mxu0 %v306
    %665 = vmatpush.msra.mxu0 %v304
    %666 = vmatpush.msra.mxu0 %v302
    %667 = vmatmul.f32.gmra.mxu0 %v107
    %v668 = vpop.f32.mrf.mxu0
    %v669 = vadd.f32 %v649, %v668
    %670 = vdwg.mxu0
    %671 = vmatpush.msra.mxu0 %v364
    %672 = vmatpush.msra.mxu0 %v362
    %673 = vmatpush.msra.mxu0 %v360
    %674 = vmatpush.msra.mxu0 %v358
    %675 = vmatpush.msra.mxu0 %v356
    %676 = vmatpush.msra.mxu0 %v354
    %677 = vmatpush.msra.mxu0 %v352
    %678 = vmatpush.msra.mxu0 %v350
    %679 = vmatpush.msra.mxu0 %v348
    %680 = vmatpush.msra.mxu0 %v346
    %681 = vmatpush.msra.mxu0 %v344
    %682 = vmatpush.msra.mxu0 %v342
    %683 = vmatpush.msra.mxu0 %v340
    %684 = vmatpush.msra.mxu0 %v338
    %685 = vmatpush.msra.mxu0 %v336
    %686 = vmatpush.msra.mxu0 %v334
    %687 = vmatmul.f32.gmra.mxu0 %v108
    %v688 = vpop.f32.mrf.mxu0
    %v689 = vadd.f32 %v669, %v688
    %690 = vdwg.mxu0
    %v691 = vmax.f32 %v529, 0.0
    %v692 = vmax.f32 %v689, 0.0
    %v693 = vld [vmem:[#allocation8] sm:$0xff]
    %v694 = vld [vmem:[#allocation8 + $0x8] sm:$0xff]
    %v695 = vld [vmem:[#allocation8 + $0x10] sm:$0xff]
    %v696 = vld [vmem:[#allocation8 + $0x18] sm:$0xff]
    %v697 = vld [vmem:[#allocation8 + $0x20] sm:$0xff]
    %v698 = vld [vmem:[#allocation8 + $0x28] sm:$0xff]
    %v699 = vld [vmem:[#allocation8 + $0x30] sm:$0xff]
    %v700 = vld [vmem:[#allocation8 + $0x38] sm:$0xff]
    %v701 = vld [vmem:[#allocation8 + $0x40] sm:$0xff]
    %v702 = vld [vmem:[#allocation8 + $0x48] sm:$0xff]
    %v703 = vld [vmem:[#allocation8 + $0x50] sm:$0xff]
    %v704 = vld [vmem:[#allocation8 + $0x58] sm:$0xff]
    %v705 = vld [vmem:[#allocation8 + $0x60] sm:$0xff]
    %v706 = vld [vmem:[#allocation8 + $0x68] sm:$0xff]
    %v707 = vld [vmem:[#allocation8 + $0x70] sm:$0xff]
    %v708 = vld [vmem:[#allocation8 + $0x78] sm:$0xff]
    %v709 = vld [vmem:[#allocation8 + $0x80] sm:$0xff]
    %v710 = vld [vmem:[#allocation8 + $0x88] sm:$0xff]
    %v711 = vld [vmem:[#allocation8 + $0x90] sm:$0xff]
    %v712 = vld [vmem:[#allocation8 + $0x98] sm:$0xff]
    %v713 = vld [vmem:[#allocation8 + $0xa0] sm:$0xff]
    %v714 = vld [vmem:[#allocation8 + $0xa8] sm:$0xff]
    %v715 = vld [vmem:[#allocation8 + $0xb0] sm:$0xff]
    %v716 = vld [vmem:[#allocation8 + $0xb8] sm:$0xff]
    %v717 = vld [vmem:[#allocation8 + $0xc0] sm:$0xff]
    %v718 = vld [vmem:[#allocation8 + $0xc8] sm:$0xff]
    %v719 = vld [vmem:[#allocation8 + $0xd0] sm:$0xff]
    %v720 = vld [vmem:[#allocation8 + $0xd8] sm:$0xff]
    %v721 = vld [vmem:[#allocation8 + $0xe0] sm:$0xff]
    %v722 = vld [vmem:[#allocation8 + $0xe8] sm:$0xff]
    %v723 = vld [vmem:[#allocation8 + $0xf0] sm:$0xff]
    %v724 = vld [vmem:[#allocation8 + $0xf8] sm:$0xff]
    %v725 = vld [vmem:[#allocation8 + $0x100] sm:$0xff]
    %v726 = vld [vmem:[#allocation8 + $0x108] sm:$0xff]
    %v727 = vld [vmem:[#allocation8 + $0x110] sm:$0xff]
    %v728 = vld [vmem:[#allocation8 + $0x118] sm:$0xff]
    %v729 = vld [vmem:[#allocation8 + $0x120] sm:$0xff]
    %v730 = vld [vmem:[#allocation8 + $0x128] sm:$0xff]
    %v731 = vld [vmem:[#allocation8 + $0x130] sm:$0xff]
    %v732 = vld [vmem:[#allocation8 + $0x138] sm:$0xff]
    %v733 = vld [vmem:[#allocation8 + $0x140] sm:$0xff]
    %v734 = vld [vmem:[#allocation8 + $0x148] sm:$0xff]
    %v735 = vld [vmem:[#allocation8 + $0x150] sm:$0xff]
    %v736 = vld [vmem:[#allocation8 + $0x158] sm:$0xff]
    %v737 = vld [vmem:[#allocation8 + $0x160] sm:$0xff]
    %v738 = vld [vmem:[#allocation8 + $0x168] sm:$0xff]
    %v739 = vld [vmem:[#allocation8 + $0x170] sm:$0xff]
    %v740 = vld [vmem:[#allocation8 + $0x178] sm:$0xff]
    %v741 = vld [vmem:[#allocation8 + $0x180] sm:$0xff]
    %v742 = vld [vmem:[#allocation8 + $0x188] sm:$0xff]
    %v743 = vld [vmem:[#allocation8 + $0x190] sm:$0xff]
    %v744 = vld [vmem:[#allocation8 + $0x198] sm:$0xff]
    %v745 = vld [vmem:[#allocation8 + $0x1a0] sm:$0xff]
    %v746 = vld [vmem:[#allocation8 + $0x1a8] sm:$0xff]
    %v747 = vld [vmem:[#allocation8 + $0x1b0] sm:$0xff]
    %v748 = vld [vmem:[#allocation8 + $0x1b8] sm:$0xff]
    %v749 = vld [vmem:[#allocation8 + $0x1c0] sm:$0xff]
    %v750 = vld [vmem:[#allocation8 + $0x1c8] sm:$0xff]
    %v751 = vld [vmem:[#allocation8 + $0x1d0] sm:$0xff]
    %v752 = vld [vmem:[#allocation8 + $0x1d8] sm:$0xff]
    %v753 = vld [vmem:[#allocation8 + $0x1e0] sm:$0xff]
    %v754 = vld [vmem:[#allocation8 + $0x1e8] sm:$0xff]
    %v755 = vld [vmem:[#allocation8 + $0x1f0] sm:$0xff]
    %v756 = vld [vmem:[#allocation8 + $0x1f8] sm:$0xff]
    %v757 = vld [vmem:[%s4] sm:$0x3]
    %v759 = vperm.slane %v757, 0
    %v760 = vperm.slane %v757, 1
    %763 = vmatpush.msra.mxu0 %v723
    %764 = vmatpush.msra.mxu0 %v721
    %765 = vmatpush.msra.mxu0 %v719
    %766 = vmatpush.msra.mxu0 %v717
    %767 = vmatpush.msra.mxu0 %v715
    %768 = vmatpush.msra.mxu0 %v713
    %769 = vmatpush.msra.mxu0 %v711
    %770 = vmatpush.msra.mxu0 %v709
    %771 = vmatpush.msra.mxu0 %v707
    %772 = vmatpush.msra.mxu0 %v705
    %773 = vmatpush.msra.mxu0 %v703
    %774 = vmatpush.msra.mxu0 %v701
    %775 = vmatpush.msra.mxu0 %v699
    %776 = vmatpush.msra.mxu0 %v697
    %777 = vmatpush.msra.mxu0 %v695
    %778 = vmatpush.msra.mxu0 %v693
    %779 = vmatmul.f32.gmra.mxu0 %v691
    %v780 = vpop.f32.mrf.mxu0
    %v781 = vadd.f32 %v759, %v780
    %782 = vdwg.mxu0
    %783 = vmatpush.msra.mxu0 %v755
    %784 = vmatpush.msra.mxu0 %v753
    %785 = vmatpush.msra.mxu0 %v751
    %786 = vmatpush.msra.mxu0 %v749
    %787 = vmatpush.msra.mxu0 %v747
    %788 = vmatpush.msra.mxu0 %v745
    %789 = vmatpush.msra.mxu0 %v743
    %790 = vmatpush.msra.mxu0 %v741
    %791 = vmatpush.msra.mxu0 %v739
    %792 = vmatpush.msra.mxu0 %v737
    %793 = vmatpush.msra.mxu0 %v735
    %794 = vmatpush.msra.mxu0 %v733
    %795 = vmatpush.msra.mxu0 %v731
    %796 = vmatpush.msra.mxu0 %v729
    %797 = vmatpush.msra.mxu0 %v727
    %798 = vmatpush.msra.mxu0 %v725
    %799 = vmatmul.f32.gmra.mxu0 %v692
    %v800 = vpop.f32.mrf.mxu0
    %v801 = vadd.f32 %v781, %v800
    %802 = vdwg.mxu0
    %803 = vmatpush.msra.mxu0 %v724
    %804 = vmatpush.msra.mxu0 %v722
    %805 = vmatpush.msra.mxu0 %v720
    %806 = vmatpush.msra.mxu0 %v718
    %807 = vmatpush.msra.mxu0 %v716
    %808 = vmatpush.msra.mxu0 %v714
    %809 = vmatpush.msra.mxu0 %v712
    %810 = vmatpush.msra.mxu0 %v710
    %811 = vmatpush.msra.mxu0 %v708
    %812 = vmatpush.msra.mxu0 %v706
    %813 = vmatpush.msra.mxu0 %v704
    %814 = vmatpush.msra.mxu0 %v702
    %815 = vmatpush.msra.mxu0 %v700
    %816 = vmatpush.msra.mxu0 %v698
    %817 = vmatpush.msra.mxu0 %v696
    %818 = vmatpush.msra.mxu0 %v694
    %819 = vmatmul.f32.gmra.mxu0 %v691
    %v820 = vpop.f32.mrf.mxu0
    %v821 = vadd.f32 %v760, %v820
    %822 = vdwg.mxu0
    %823 = vmatpush.msra.mxu0 %v756
    %824 = vmatpush.msra.mxu0 %v754
    %825 = vmatpush.msra.mxu0 %v752
    %826 = vmatpush.msra.mxu0 %v750
    %827 = vmatpush.msra.mxu0 %v748
    %828 = vmatpush.msra.mxu0 %v746
    %829 = vmatpush.msra.mxu0 %v744
    %830 = vmatpush.msra.mxu0 %v742
    %831 = vmatpush.msra.mxu0 %v740
    %832 = vmatpush.msra.mxu0 %v738
    %833 = vmatpush.msra.mxu0 %v736
    %834 = vmatpush.msra.mxu0 %v734
    %835 = vmatpush.msra.mxu0 %v732
    %836 = vmatpush.msra.mxu0 %v730
    %837 = vmatpush.msra.mxu0 %v728
    %838 = vmatpush.msra.mxu0 %v726
    %839 = vmatmul.f32.gmra.mxu0 %v692
    %v840 = vpop.f32.mrf.mxu0
    %v841 = vadd.f32 %v821, %v840
    %842 = vdwg.mxu0
    %v843 = vmax.f32 %v801, 0.0
    %v844 = vmax.f32 %v841, 0.0
    %v845 = vld [vmem:[#allocation10] sm:$0xff]
    %v846 = vld [vmem:[#allocation10 + $0x8] sm:$0xff]
    %v847 = vld [vmem:[#allocation10 + $0x10] sm:$0xff]
    %v848 = vld [vmem:[#allocation10 + $0x18] sm:$0xff]
    %v849 = vld [vmem:[#allocation10 + $0x20] sm:$0xff]
    %v850 = vld [vmem:[#allocation10 + $0x28] sm:$0xff]
    %v851 = vld [vmem:[#allocation10 + $0x30] sm:$0xff]
    %v852 = vld [vmem:[#allocation10 + $0x38] sm:$0xff]
    %v853 = vld [vmem:[#allocation10 + $0x40] sm:$0xff]
    %v854 = vld [vmem:[#allocation10 + $0x48] sm:$0xff]
    %v855 = vld [vmem:[#allocation10 + $0x50] sm:$0xff]
    %v856 = vld [vmem:[#allocation10 + $0x58] sm:$0xff]
    %v857 = vld [vmem:[#allocation10 + $0x60] sm:$0xff]
    %v858 = vld [vmem:[#allocation10 + $0x68] sm:$0xff]
    %v859 = vld [vmem:[#allocation10 + $0x70] sm:$0xff]
    %v860 = vld [vmem:[#allocation10 + $0x78] sm:$0xff]
    %v861 = vld [vmem:[#allocation10 + $0x80] sm:$0xff]
    %v862 = vld [vmem:[#allocation10 + $0x88] sm:$0xff]
    %v863 = vld [vmem:[#allocation10 + $0x90] sm:$0xff]
    %v864 = vld [vmem:[#allocation10 + $0x98] sm:$0xff]
    %v865 = vld [vmem:[#allocation10 + $0xa0] sm:$0xff]
    %v866 = vld [vmem:[#allocation10 + $0xa8] sm:$0xff]
    %v867 = vld [vmem:[#allocation10 + $0xb0] sm:$0xff]
    %v868 = vld [vmem:[#allocation10 + $0xb8] sm:$0xff]
    %v869 = vld [vmem:[#allocation10 + $0xc0] sm:$0xff]
    %v870 = vld [vmem:[#allocation10 + $0xc8] sm:$0xff]
    %v871 = vld [vmem:[#allocation10 + $0xd0] sm:$0xff]
    %v872 = vld [vmem:[#allocation10 + $0xd8] sm:$0xff]
    %v873 = vld [vmem:[#allocation10 + $0xe0] sm:$0xff]
    %v874 = vld [vmem:[#allocation10 + $0xe8] sm:$0xff]
    %v875 = vld [vmem:[#allocation10 + $0xf0] sm:$0xff]
    %v876 = vld [vmem:[#allocation10 + $0xf8] sm:$0xff]
    %v877 = vld [vmem:[%s6] sm:$0x1]
    %v879 = vperm.slane %v877, 0
    %881 = vmatpush.msra.mxu0 %v860
    %882 = vmatpush.msra.mxu0 %v859
    %883 = vmatpush.msra.mxu0 %v858
    %884 = vmatpush.msra.mxu0 %v857
    %885 = vmatpush.msra.mxu0 %v856
    %886 = vmatpush.msra.mxu0 %v855
    %887 = vmatpush.msra.mxu0 %v854
    %888 = vmatpush.msra.mxu0 %v853
    %889 = vmatpush.msra.mxu0 %v852
    %890 = vmatpush.msra.mxu0 %v851
    %891 = vmatpush.msra.mxu0 %v850
    %892 = vmatpush.msra.mxu0 %v849
    %893 = vmatpush.msra.mxu0 %v848
    %894 = vmatpush.msra.mxu0 %v847
    %895 = vmatpush.msra.mxu0 %v846
    %896 = vmatpush.msra.mxu0 %v845
    %897 = vmatmul.f32.gmra.mxu0 %v843
    %v898 = vpop.f32.mrf.mxu0
    %v899 = vadd.f32 %v879, %v898
    %900 = vdwg.mxu0
    %901 = vmatpush.msra.mxu0 %v876
    %902 = vmatpush.msra.mxu0 %v875
    %903 = vmatpush.msra.mxu0 %v874
    %904 = vmatpush.msra.mxu0 %v873
    %905 = vmatpush.msra.mxu0 %v872
    %906 = vmatpush.msra.mxu0 %v871
    %907 = vmatpush.msra.mxu0 %v870
    %908 = vmatpush.msra.mxu0 %v869
    %909 = vmatpush.msra.mxu0 %v868
    %910 = vmatpush.msra.mxu0 %v867
    %911 = vmatpush.msra.mxu0 %v866
    %912 = vmatpush.msra.mxu0 %v865
    %913 = vmatpush.msra.mxu0 %v864
    %914 = vmatpush.msra.mxu0 %v863
    %915 = vmatpush.msra.mxu0 %v862
    %916 = vmatpush.msra.mxu0 %v861
    %917 = vmatmul.f32.gmra.mxu0 %v844
    %v918 = vpop.f32.mrf.mxu0
    %v919 = vadd.f32 %v899, %v918
    %920 = vdwg.mxu0
    %921 = vst [vmem:[#allocation11] sm:$0xff] %v919
    // Predicated region
    $region50: #{tpu_custom_call.1} parent=1 // pred_check
      _
    $region51: #{tpu_custom_call.1} parent=1 // pred_check_branch
      %923 = sbr.rel (0) target = $region53
    $region52: #{tpu_custom_call.1} parent=1 // pred_region
      %925 = vsyncadd [#allocation4], 0
      %s927 = sshll.u32 [#allocation11], 4
      %s928 = int_to_ptr.vmem [resolvable:$true] %s927
      %s929 = sshll.u32 %s7, 4
      %s930 = int_to_ptr.hbm [resolvable:$true] %s929
      %932 = dma.vmem_to_hbm [thread:$0]  %s928, 128, %s930, [#allocation4]
    $region53: #{tpu_custom_call.1} parent=1 // pred_fallthru
      _
    // Predicated region
    $region54: #{tpu_custom_call.1} parent=1 // pred_check
      _
    $region55: #{tpu_custom_call.1} parent=1 // pred_check_branch
      %934 = sbr.rel (0) target = $region57
    $region56: #{tpu_custom_call.1} parent=1 // pred_region
      %936 = dma.done [#allocation4], 128
    $region57: #{tpu_custom_call.1} parent=1 // pred_fallthru
      _
    %937 = vsyncpa [#allocation3], 1
    %938 = vsyncpa [#allocation6], 1
    %939 = vsyncpa [#allocation9], 1
    %940 = vsyncpa [#allocation4], 1

</llo_original>
